<compile_context>
chip_gen: v6e
topology: v6e:2x2x1
jax: 0.10.0
libtpu: 0.0.40
codegen_flags: <defaults>
</compile_context>

<pallas_src>
import functools

import jax
import jax.numpy as jnp
from jax.experimental import pallas as pl
from jax.experimental.pallas import tpu as pltpu


# ---------------------------------------------------------------------------
# helpers
# ---------------------------------------------------------------------------
def _round_up(v, m):
    return (v + m - 1) // m * m


def _choose_tiles(n):
    """Return (n_pad, tm, tk) with (8,128)-aligned tiles that divide n_pad."""
    n128 = _round_up(max(n, 8), 128)
    if n128 <= 1024:
        # Small graph: one block per axis (lane/sublane aligned, single step).
        return n128, n128, n128
    # Large graph: big streaming tiles so DMA time dominates per-step overhead.
    n_pad = _round_up(n, 512)
    tm = 512
    tk = 512
    for cand in (2048, 1024):
        if n_pad % cand == 0:
            tk = cand
            break
    return n_pad, tm, tk


_VMEM_LIMIT = 48 * 1024 * 1024
_XW_RESIDENT_BYTES = 8 * 1024 * 1024   # keep XW resident if <= 8 MiB (x2 bufs)


# ---------------------------------------------------------------------------
# Pallas kernels
# ---------------------------------------------------------------------------
def xw_kernel(x_ref, w_ref, o_ref):
    # XW = X @ W ; cast operands to bf16 for the fast MXU path, accumulate f32,
    # emit bf16 so the big aggregation kernel streams a half-width operand.
    o_ref[...] = jnp.dot(
        x_ref[...].astype(jnp.bfloat16),
        w_ref[...].astype(jnp.bfloat16),
        preferred_element_type=jnp.float32,
    ).astype(o_ref.dtype)


def gcn_agg_resident_kernel(a_ref, xw_ref, b_ref, o_ref, *, tk):
    # out = relu(A_norm @ XW + b); A streamed tile-by-tile over k, XW resident
    # in VMEM (constant block index), f32 output block used as accumulator.
    k = pl.program_id(1)

    @pl.when(k == 0)
    def _():
        o_ref[...] = jnp.broadcast_to(b_ref[...], o_ref.shape)

    start = pl.multiple_of(k * tk, tk)
    xw = xw_ref[pl.ds(start, tk), :]
    o_ref[...] += jnp.dot(a_ref[...], xw, preferred_element_type=jnp.float32)

    @pl.when(k == pl.num_programs(1) - 1)
    def _():
        o_ref[...] = jnp.maximum(o_ref[...], 0.0)


def gcn_agg_stream_kernel(a_ref, xw_ref, b_ref, o_ref):
    # Fallback when XW is too large to keep resident: stream a (tk, fo) slab.
    k = pl.program_id(1)

    @pl.when(k == 0)
    def _():
        o_ref[...] = jnp.broadcast_to(b_ref[...], o_ref.shape)

    o_ref[...] += jnp.dot(
        a_ref[...], xw_ref[...], preferred_element_type=jnp.float32)

    @pl.when(k == pl.num_programs(1) - 1)
    def _():
        o_ref[...] = jnp.maximum(o_ref[...], 0.0)


# ---------------------------------------------------------------------------
# pallas_call wrappers
# ---------------------------------------------------------------------------
def xw_matmul(x_pad, w_pad, tm):
    """(n_pad, fi_p) @ (fi_p, fo_p) -> (n_pad, fo_p) bf16, tiled over rows."""
    n_pad, fi = x_pad.shape
    fo = w_pad.shape[1]
    return pl.pallas_call(
        xw_kernel,
        out_shape=jax.ShapeDtypeStruct((n_pad, fo), jnp.bfloat16),
        grid=(n_pad // tm,),
        in_specs=[pl.BlockSpec((tm, fi), lambda i: (i, 0)),
                  pl.BlockSpec((fi, fo), lambda i: (0, 0))],
        out_specs=pl.BlockSpec((tm, fo), lambda i: (i, 0)),
        compiler_params=pltpu.CompilerParams(
            dimension_semantics=("parallel",),
            vmem_limit_bytes=_VMEM_LIMIT),
    )(x_pad, w_pad)


def gcn_aggregate(a_bf16, xw_bf16, b_pad, tm, tk):
    """relu(A_norm @ XW + b): grid (row tiles, K tiles), f32 output accum."""
    n_pad = a_bf16.shape[0]
    fo = xw_bf16.shape[1]

    if n_pad * fo * 2 <= _XW_RESIDENT_BYTES:
        kernel = functools.partial(gcn_agg_resident_kernel, tk=tk)
        xw_spec = pl.BlockSpec((n_pad, fo), lambda i, k: (0, 0))  # resident
    else:
        kernel = gcn_agg_stream_kernel
        xw_spec = pl.BlockSpec((tk, fo), lambda i, k: (k, 0))     # streamed

    return pl.pallas_call(
        kernel,
        out_shape=jax.ShapeDtypeStruct((n_pad, fo), jnp.float32),
        grid=(n_pad // tm, n_pad // tk),
        in_specs=[pl.BlockSpec((tm, tk), lambda i, k: (i, k)),    # A_norm tile
                  xw_spec,                                        # XW
                  pl.BlockSpec((1, fo), lambda i, k: (0, 0))],    # bias
        out_specs=pl.BlockSpec((tm, fo), lambda i, k: (i, 0)),
        compiler_params=pltpu.CompilerParams(
            dimension_semantics=("parallel", "arbitrary"),
            vmem_limit_bytes=_VMEM_LIMIT),
    )(a_bf16, xw_bf16, b_pad)


# ---------------------------------------------------------------------------
# Plain-JAX glue: padded normalized adjacency  D^{-1/2}(A+I)D^{-1/2} in bf16.
# (matches torch_geometric gcn_norm: add_self_loops=True, symmetric norm)
# ---------------------------------------------------------------------------
def build_norm_adj_padded(edge_index, edge_weight, num_nodes, n_pad):
    src = edge_index[0]
    dst = edge_index[1]
    if edge_weight is None:
        edge_weight = jnp.ones((edge_index.shape[1],), jnp.float32)
    a = jnp.zeros((n_pad, n_pad), jnp.float32)
    a = a.at[dst, src].add(edge_weight)                  # message flow src->dst
    idx = jnp.arange(num_nodes)
    a = a.at[idx, idx].add(1.0)                          # self loops, real rows
    deg = a.sum(axis=1)
    dinv = jnp.where(deg > 0.0, jax.lax.rsqrt(deg), 0.0)
    # fused scale + cast (one pass); padded rows/cols stay exactly zero
    return (dinv[:, None] * a * dinv[None, :]).astype(jnp.bfloat16)


# ---------------------------------------------------------------------------
# DiGCL_Encoder parameters + forward
# ---------------------------------------------------------------------------
def init_params(key, in_channels, out_channels, num_layers=2):
    """Glorot-uniform weights + zero bias, mirroring GCNConv shapes."""
    dims = [in_channels] + [2 * out_channels] * (num_layers - 1) + [out_channels]
    params = []
    for i in range(num_layers):
        key, sub = jax.random.split(key)
        f_in, f_out = dims[i], dims[i + 1]
        bound = jnp.sqrt(6.0 / (f_in + f_out))
        w = jax.random.uniform(sub, (f_in, f_out), jnp.float32, -bound, bound)
        b = jnp.zeros((f_out,), jnp.float32)
        params.append((w, b))
    return params


def digcl_encoder_forward(x, edge_index, edge_weight, params, out_channels):
    n, f_in0 = x.shape
    n_pad, tm, tk = _choose_tiles(n)

    # Normalized adjacency built directly at padded size, cast to bf16 fused.
    a_bf16 = build_norm_adj_padded(edge_index, edge_weight, n, n_pad)

    # Lane-dense padded node features.
    fi_p0 = _round_up(f_in0, 128)
    h = jnp.zeros((n_pad, fi_p0), jnp.float32).at[:n, :f_in0].set(x)

    for (w, b) in params:
        f_in, f_out = w.shape
        fi_p = _round_up(f_in, 128)
        fo_p = _round_up(f_out, 128)
        w_pad = jnp.zeros((fi_p, fo_p), jnp.float32).at[:f_in, :f_out].set(w)
        b_pad = jnp.zeros((1, fo_p), jnp.float32).at[0, :f_out].set(b)

        xw = xw_matmul(h, w_pad, tm)                     # (n_pad, fo_p) bf16
        h = gcn_aggregate(a_bf16, xw, b_pad, tm, tk)     # (n_pad, fo_p) f32

    return h[:n, :out_channels]


def reference_forward(x, edge_index, edge_weight, params):
    """Pure-JAX f32 reference (un-tiled, un-padded) for correctness check."""
    n = x.shape[0]
    src, dst = edge_index[0], edge_index[1]
    ew = (jnp.ones((edge_index.shape[1],), jnp.float32)
          if edge_weight is None else edge_weight)
    a = jnp.zeros((n, n), jnp.float32).at[dst, src].add(ew) + jnp.eye(n)
    deg = a.sum(axis=1)
    dinv = jnp.where(deg > 0.0, 1.0 / jnp.sqrt(deg), 0.0)
    a = dinv[:, None] * a * dinv[None, :]
    h = x
    for (w, b) in params:
        h = jnp.maximum(a @ (h @ w) + b[None, :], 0.0)
    return h


# ---------------------------------------------------------------------------
if __name__ == "__main__":
    key = jax.random.PRNGKey(0)

    # Small deterministic problem: 32 nodes, in_channels=16, out_channels=8.
    num_nodes = 32
    in_channels = 16
    out_channels = 8
    num_layers = 2

    k_x, k_w, k_ew = jax.random.split(key, 3)

    # Node features (N, F_in)
    x = jax.random.normal(k_x, (num_nodes, in_channels), jnp.float32)

    # Directed ring graph plus a "skip-2" ring -> 2*N directed edges.
    idx = jnp.arange(num_nodes)
    src = jnp.concatenate([idx, idx])
    dst = jnp.concatenate([(idx + 1) % num_nodes, (idx + 2) % num_nodes])
    edge_index = jnp.stack([src, dst]).astype(jnp.int32)        # (2, E)
    edge_weight = jax.random.uniform(
        k_ew, (edge_index.shape[1],), jnp.float32, 0.5, 1.5)     # (E,)

    params = init_params(k_w, in_channels, out_channels, num_layers)

    out = digcl_encoder_forward(x, edge_index, edge_weight, params, out_channels)
    out = jax.block_until_ready(out)

    assert out.shape == (num_nodes, out_channels), out.shape
    assert out.dtype == jnp.float32
    assert bool(jnp.all(jnp.isfinite(out)))

    # Correctness vs. pure-JAX f32 reference (loose tol: A/X/W use bf16 on MXU).
    ref = reference_forward(x, edge_index, edge_weight, params)
    assert bool(jnp.allclose(out, ref, rtol=5e-2, atol=5e-2)), (
        float(jnp.max(jnp.abs(out - ref))))

    print("KERNEL_OK")
</pallas_src>

<mosaic_0001>
module attributes {stable_mosaic.version = 11 : i64} {
  func.func @xw_kernel(%arg0: i32, %arg1: memref<128x128xf32, #tpu.memory_space<vmem>>, %arg2: memref<128x128xf32, #tpu.memory_space<vmem>>, %arg3: memref<128x128xbf16, #tpu.memory_space<vmem>>) attributes {dimension_semantics = [#tpu.dimension_semantics<parallel>], iteration_bounds = array<i64: 1>, scalar_prefetch = 0 : i64, scratch_operands = 0 : i64, tpu.core_type = #tpu.core_type<tc>, window_params = [{transform_indices = @transform_0, window_bounds = array<i64: 128, 128>}, {pipeline_mode = #tpu.pipeline_mode<synchronous>, transform_indices = @transform_1, window_bounds = array<i64: 128, 128>}, {transform_indices = @transform_2, window_bounds = array<i64: 128, 128>}]} {
    %c0 = arith.constant 0 : index
    %c0_0 = arith.constant 0 : index
    %0 = vector.load %arg1[%c0, %c0_0] : memref<128x128xf32, #tpu.memory_space<vmem>>, vector<128x128xf32>
    %1 = arith.truncf %0 : vector<128x128xf32> to vector<128x128xbf16>
    %c0_1 = arith.constant 0 : index
    %c0_2 = arith.constant 0 : index
    %2 = vector.load %arg2[%c0_1, %c0_2] : memref<128x128xf32, #tpu.memory_space<vmem>>, vector<128x128xf32>
    %3 = arith.truncf %2 : vector<128x128xf32> to vector<128x128xbf16>
    %cst = arith.constant dense<0.000000e+00> : vector<128x128xf32>
    %4 = tpu.matmul %1, %3, %cst {dimension_numbers = #tpu.dot_dimension_numbers<[1], [0], [0], [1], [0, 0, 1, 1], [], []>} : vector<128x128xbf16>, vector<128x128xbf16>, vector<128x128xf32> -> vector<128x128xf32>
    %5 = arith.truncf %4 : vector<128x128xf32> to vector<128x128xbf16>
    %c0_3 = arith.constant 0 : index
    %c0_4 = arith.constant 0 : index
    %6 = vector.load %arg3[%c0_3, %c0_4] : memref<128x128xbf16, #tpu.memory_space<vmem>>, vector<128x128xbf16>
    tpu.vector_store %arg3[%c0_3, %c0_4], %5 {strides = array<i32>} : memref<128x128xbf16, #tpu.memory_space<vmem>>, vector<128x128xbf16>,
    return
  }
  func.func @transform_0(%arg0: i32) -> (i32, i32) {
    %c0_i32 = arith.constant 0 : i32
    %c0_i32_0 = arith.constant 0 : i32
    return %arg0, %c0_i32 : i32, i32
  }
  func.func @transform_1(%arg0: i32) -> (i32, i32) {
    %c0_i32 = arith.constant 0 : i32
    %c0_i32_0 = arith.constant 0 : i32
    %c0_i32_1 = arith.constant 0 : i32
    return %c0_i32, %c0_i32_0 : i32, i32
  }
  func.func @transform_2(%arg0: i32) -> (i32, i32) {
    %c0_i32 = arith.constant 0 : i32
    %c0_i32_0 = arith.constant 0 : i32
    return %arg0, %c0_i32 : i32, i32
  }
}

</mosaic_0001>

<llo_original>
// kernel: tpu_custom_call.1
$region0: #{tpu_custom_call.1}
  #allocation0 [shape = 'u32[]', space=smem, size = 0x4, offset = 0x4, fixed_abs, tag = 'smem constant byte address 0x4 - core index']
  #allocation1 [shape = 'u32[144,128]{1,0:T(1,128)}', space=vmem, size = 0x12000, scoped, tag = 'internal scratch']
  %s0 = inlined_call_operand.hbm [shape: f32[128,128], index: 0, kind: input, shape index: {}]
  %s1 = inlined_call_operand.hbm [shape: f32[128,128], index: 1, kind: input, shape index: {}]
  %s2 = inlined_call_operand.hbm [shape: bf16[128,128], index: 2, kind: output, shape index: {}]
  %s3 = sld [smem:[#allocation0]]
  $region26: #{tpu_custom_call.1} parent=0
    _
  %s5 = ssub.s32 1, %s3
  %s6 = scalar_select 0, %s5, %s3
  $region1: #{tpu_custom_call.1} parent=0
    #allocation2 [shape = 'u8[65536]{0}', space=vmem, size = 0x10000, scoped, tag = 'input window, operand 0, single buffered']
    #allocation3 [shape = 's32[1]{0}', space=sflag, size = 0x4, scoped, tag = 'scoped memory for tpu_custom_call.1']
    #allocation4 [shape = 's32[1]{0}', space=sflag, size = 0x4, scoped, tag = 'scoped memory for tpu_custom_call.1']
    #allocation5 [shape = 'u8[65536]{0}', space=vmem, size = 0x10000, scoped, tag = 'input window, operand 1, single buffered']
    #allocation6 [shape = 's32[1]{0}', space=sflag, size = 0x4, scoped, tag = 'scoped memory for tpu_custom_call.1']
    #allocation7 [shape = 'u8[32768]{0}', space=vmem, size = 0x8000, scoped, tag = 'output window, operand 0, single buffered']
    %7 = vsyncpa [#allocation3], 0
    %8 = vsyncpa [#allocation6], 0
    %9 = vsyncpa [#allocation4], 0
    // Predicated region
    $region2: #{tpu_custom_call.1} parent=1 // pred_check
      _
    $region3: #{tpu_custom_call.1} parent=1 // pred_check_branch
      %11 = sbr.rel (0) target = $region5
    $region4: #{tpu_custom_call.1} parent=1 // pred_region
      %s13 = ssub.s32 2048, 2048
      %14 = vsyncadd [#allocation3], %s13
      %s15 = sshll.u32 [#allocation2], 4
      %s16 = int_to_ptr.vmem [resolvable:$true] %s15
      %21 = dma.hbm_to_vmem [thread:$0]  %s0, 2048, %s16, [#allocation3], 128, 128, 8
    $region5: #{tpu_custom_call.1} parent=1 // pred_fallthru
      _
    // Predicated region
    $region6: #{tpu_custom_call.1} parent=1 // pred_check
      _
    $region7: #{tpu_custom_call.1} parent=1 // pred_check_branch
      %23 = sbr.rel (0) target = $region9
    $region8: #{tpu_custom_call.1} parent=1 // pred_region
      %s25 = ssub.s32 2048, 2048
      %26 = vsyncadd [#allocation6], %s25
      %s27 = sshll.u32 [#allocation5], 4
      %s28 = int_to_ptr.vmem [resolvable:$true] %s27
      %33 = dma.hbm_to_vmem [thread:$0]  %s1, 2048, %s28, [#allocation6], 128, 128, 8
    $region9: #{tpu_custom_call.1} parent=1 // pred_fallthru
      _
    // Predicated region
    $region10: #{tpu_custom_call.1} parent=1 // pred_check
      _
    $region11: #{tpu_custom_call.1} parent=1 // pred_check_branch
      %35 = sbr.rel (0) target = $region13
    $region12: #{tpu_custom_call.1} parent=1 // pred_region
      %36 = dma.done [#allocation3], 2048
    $region13: #{tpu_custom_call.1} parent=1 // pred_fallthru
      _
    // Predicated region
    $region14: #{tpu_custom_call.1} parent=1 // pred_check
      _
    $region15: #{tpu_custom_call.1} parent=1 // pred_check_branch
      %38 = sbr.rel (0) target = $region17
    $region16: #{tpu_custom_call.1} parent=1 // pred_region
      %39 = dma.done [#allocation6], 2048
    $region17: #{tpu_custom_call.1} parent=1 // pred_fallthru
      _
    %v41 = vld [vmem:[#allocation2] sm:$0xff]
    %v42 = vld [vmem:[#allocation2 + $0x8] sm:$0xff]
    %v43 = vld [vmem:[#allocation2 + $0x10] sm:$0xff]
    %v44 = vld [vmem:[#allocation2 + $0x18] sm:$0xff]
    %v45 = vld [vmem:[#allocation2 + $0x20] sm:$0xff]
    %v46 = vld [vmem:[#allocation2 + $0x28] sm:$0xff]
    %v47 = vld [vmem:[#allocation2 + $0x30] sm:$0xff]
    %v48 = vld [vmem:[#allocation2 + $0x38] sm:$0xff]
    %v49 = vld [vmem:[#allocation2 + $0x40] sm:$0xff]
    %v50 = vld [vmem:[#allocation2 + $0x48] sm:$0xff]
    %v51 = vld [vmem:[#allocation2 + $0x50] sm:$0xff]
    %v52 = vld [vmem:[#allocation2 + $0x58] sm:$0xff]
    %v53 = vld [vmem:[#allocation2 + $0x60] sm:$0xff]
    %v54 = vld [vmem:[#allocation2 + $0x68] sm:$0xff]
    %v55 = vld [vmem:[#allocation2 + $0x70] sm:$0xff]
    %v56 = vld [vmem:[#allocation2 + $0x78] sm:$0xff]
    %v57 = vpack.c.bf16 %v42, %v41
    %v58 = vpack.c.bf16 %v44, %v43
    %v59 = vpack.c.bf16 %v46, %v45
    %v60 = vpack.c.bf16 %v48, %v47
    %v61 = vpack.c.bf16 %v50, %v49
    %v62 = vpack.c.bf16 %v52, %v51
    %v63 = vpack.c.bf16 %v54, %v53
    %v64 = vpack.c.bf16 %v56, %v55
    %v65 = vld [vmem:[#allocation5] sm:$0xff]
    %v66 = vld [vmem:[#allocation5 + $0x8] sm:$0xff]
    %v67 = vld [vmem:[#allocation5 + $0x10] sm:$0xff]
    %v68 = vld [vmem:[#allocation5 + $0x18] sm:$0xff]
    %v69 = vld [vmem:[#allocation5 + $0x20] sm:$0xff]
    %v70 = vld [vmem:[#allocation5 + $0x28] sm:$0xff]
    %v71 = vld [vmem:[#allocation5 + $0x30] sm:$0xff]
    %v72 = vld [vmem:[#allocation5 + $0x38] sm:$0xff]
    %v73 = vld [vmem:[#allocation5 + $0x40] sm:$0xff]
    %v74 = vld [vmem:[#allocation5 + $0x48] sm:$0xff]
    %v75 = vld [vmem:[#allocation5 + $0x50] sm:$0xff]
    %v76 = vld [vmem:[#allocation5 + $0x58] sm:$0xff]
    %v77 = vld [vmem:[#allocation5 + $0x60] sm:$0xff]
    %v78 = vld [vmem:[#allocation5 + $0x68] sm:$0xff]
    %v79 = vld [vmem:[#allocation5 + $0x70] sm:$0xff]
    %v80 = vld [vmem:[#allocation5 + $0x78] sm:$0xff]
    %v81 = vpack.c.bf16 %v66, %v65
    %v82 = vpack.c.bf16 %v68, %v67
    %v83 = vpack.c.bf16 %v70, %v69
    %v84 = vpack.c.bf16 %v72, %v71
    %v85 = vpack.c.bf16 %v74, %v73
    %v86 = vpack.c.bf16 %v76, %v75
    %v87 = vpack.c.bf16 %v78, %v77
    %v88 = vpack.c.bf16 %v80, %v79
    %89 = vmatprep.subr.bf16.mxu0 0
    %90 = vmatpush1.bf16.msra.mxu0 %v88
    %91 = vmatprep.subr.bf16.mxu0 0
    %92 = vmatpush1.bf16.msra.mxu0 %v87
    %93 = vmatprep.subr.bf16.mxu0 0
    %94 = vmatpush1.bf16.msra.mxu0 %v86
    %95 = vmatprep.subr.bf16.mxu0 0
    %96 = vmatpush1.bf16.msra.mxu0 %v85
    %97 = vmatprep.subr.bf16.mxu0 0
    %98 = vmatpush1.bf16.msra.mxu0 %v84
    %99 = vmatprep.subr.bf16.mxu0 0
    %100 = vmatpush1.bf16.msra.mxu0 %v83
    %101 = vmatprep.subr.bf16.mxu0 0
    %102 = vmatpush1.bf16.msra.mxu0 %v82
    %103 = vmatprep.subr.bf16.mxu0 0
    %104 = vmatpush1.bf16.msra.mxu0 %v81
    %105 = vmatprep.subr.bf16.mxu0 0
    %106 = vmatpush2.bf16.msra.mxu0 0
    %107 = vmatprep.subr.bf16.mxu0 0
    %108 = vmatpush2.bf16.msra.mxu0 0
    %109 = vmatprep.subr.bf16.mxu0 0
    %110 = vmatpush2.bf16.msra.mxu0 0
    %111 = vmatprep.subr.bf16.mxu0 0
    %112 = vmatpush2.bf16.msra.mxu0 0
    %113 = vmatprep.subr.bf16.mxu0 0
    %114 = vmatpush2.bf16.msra.mxu0 0
    %115 = vmatprep.subr.bf16.mxu0 0
    %116 = vmatpush2.bf16.msra.mxu0 0
    %117 = vmatprep.subr.bf16.mxu0 0
    %118 = vmatpush2.bf16.msra.mxu0 0
    %119 = vmatprep.subr.bf16.mxu0 0
    %120 = vmatpush2.bf16.msra.mxu0 0
    %121 = vmatprep.mubr.bf16.mxu0 0
    %122 = vmatmul.mubr.bf16.gmra.mxu0 %v57
    %v123 = vpop.f32.mrf.mxu0
    %v124 = vadd.f32 0.0, %v123
    %v125 = vpop.f32.mrf.mxu0
    %v126 = vpop.f32.mrf.mxu0
    %v127 = vadd.f32 0.0, %v126
    %v128 = vpop.f32.mrf.mxu0
    %129 = vmatprep.mubr.bf16.mxu0 0
    %130 = vmatmul.mubr.bf16.gmra.mxu0 %v58
    %v131 = vpop.f32.mrf.mxu0
    %v132 = vadd.f32 0.0, %v131
    %v133 = vpop.f32.mrf.mxu0
    %v134 = vpop.f32.mrf.mxu0
    %v135 = vadd.f32 0.0, %v134
    %v136 = vpop.f32.mrf.mxu0
    %137 = vmatprep.mubr.bf16.mxu0 0
    %138 = vmatmul.mubr.bf16.gmra.mxu0 %v59
    %v139 = vpop.f32.mrf.mxu0
    %v140 = vadd.f32 0.0, %v139
    %v141 = vpop.f32.mrf.mxu0
    %v142 = vpop.f32.mrf.mxu0
    %v143 = vadd.f32 0.0, %v142
    %v144 = vpop.f32.mrf.mxu0
    %145 = vmatprep.mubr.bf16.mxu0 0
    %146 = vmatmul.mubr.bf16.gmra.mxu0 %v60
    %v147 = vpop.f32.mrf.mxu0
    %v148 = vadd.f32 0.0, %v147
    %v149 = vpop.f32.mrf.mxu0
    %v150 = vpop.f32.mrf.mxu0
    %v151 = vadd.f32 0.0, %v150
    %v152 = vpop.f32.mrf.mxu0
    %153 = vmatprep.mubr.bf16.mxu0 0
    %154 = vmatmul.mubr.bf16.gmra.mxu0 %v61
    %v155 = vpop.f32.mrf.mxu0
    %v156 = vadd.f32 0.0, %v155
    %v157 = vpop.f32.mrf.mxu0
    %v158 = vpop.f32.mrf.mxu0
    %v159 = vadd.f32 0.0, %v158
    %v160 = vpop.f32.mrf.mxu0
    %161 = vmatprep.mubr.bf16.mxu0 0
    %162 = vmatmul.mubr.bf16.gmra.mxu0 %v62
    %v163 = vpop.f32.mrf.mxu0
    %v164 = vadd.f32 0.0, %v163
    %v165 = vpop.f32.mrf.mxu0
    %v166 = vpop.f32.mrf.mxu0
    %v167 = vadd.f32 0.0, %v166
    %v168 = vpop.f32.mrf.mxu0
    %169 = vmatprep.mubr.bf16.mxu0 0
    %170 = vmatmul.mubr.bf16.gmra.mxu0 %v63
    %v171 = vpop.f32.mrf.mxu0
    %v172 = vadd.f32 0.0, %v171
    %v173 = vpop.f32.mrf.mxu0
    %v174 = vpop.f32.mrf.mxu0
    %v175 = vadd.f32 0.0, %v174
    %v176 = vpop.f32.mrf.mxu0
    %177 = vmatprep.mubr.bf16.mxu0 0
    %178 = vmatmul.mubr.bf16.gmra.mxu0 %v64
    %v179 = vpop.f32.mrf.mxu0
    %v180 = vadd.f32 0.0, %v179
    %v181 = vpop.f32.mrf.mxu0
    %v182 = vpop.f32.mrf.mxu0
    %v183 = vadd.f32 0.0, %v182
    %v184 = vpop.f32.mrf.mxu0
    %185 = vdwg.mxu0
    %v186 = vpack.c.bf16 %v127, %v124
    %v187 = vpack.c.bf16 %v135, %v132
    %v188 = vpack.c.bf16 %v143, %v140
    %v189 = vpack.c.bf16 %v151, %v148
    %v190 = vpack.c.bf16 %v159, %v156
    %v191 = vpack.c.bf16 %v167, %v164
    %v192 = vpack.c.bf16 %v175, %v172
    %v193 = vpack.c.bf16 %v183, %v180
    %v202 = vunpack.c.l.b16 %v186
    %v203 = vunpack.c.h.b16 %v186
    %v204 = vunpack.c.l.b16 %v187
    %v205 = vunpack.c.h.b16 %v187
    %v206 = vunpack.c.l.b16 %v188
    %v207 = vunpack.c.h.b16 %v188
    %v208 = vunpack.c.l.b16 %v189
    %v209 = vunpack.c.h.b16 %v189
    %v210 = vunpack.c.l.b16 %v190
    %v211 = vunpack.c.h.b16 %v190
    %v212 = vunpack.c.l.b16 %v191
    %v213 = vunpack.c.h.b16 %v191
    %v214 = vunpack.c.l.b16 %v192
    %v215 = vunpack.c.h.b16 %v192
    %v216 = vunpack.c.l.b16 %v193
    %v217 = vunpack.c.h.b16 %v193
    %v218 = vpack.c.b16 %v202, %v202
    %v219 = vpack.c.b16 %v203, %v203
    %v220 = vpack.c.b16 %v204, %v204
    %v221 = vpack.c.b16 %v205, %v205
    %v222 = vpack.c.b16 %v206, %v206
    %v223 = vpack.c.b16 %v207, %v207
    %v224 = vpack.c.b16 %v208, %v208
    %v225 = vpack.c.b16 %v209, %v209
    %v226 = vpack.c.b16 %v210, %v210
    %v227 = vpack.c.b16 %v211, %v211
    %v228 = vpack.c.b16 %v212, %v212
    %v229 = vpack.c.b16 %v213, %v213
    %v230 = vpack.c.b16 %v214, %v214
    %v231 = vpack.c.b16 %v215, %v215
    %v232 = vpack.c.b16 %v216, %v216
    %v233 = vpack.c.b16 %v217, %v217
    %250 = vst [vmem:[#allocation7] sm:$0xf] %v218
    %251 = vst [vmem:[#allocation7 + $0x4] sm:$0xf] %v219
    %252 = vst [vmem:[#allocation7 + $0x8] sm:$0xf] %v220
    %253 = vst [vmem:[#allocation7 + $0xc] sm:$0xf] %v221
    %254 = vst [vmem:[#allocation7 + $0x10] sm:$0xf] %v222
    %255 = vst [vmem:[#allocation7 + $0x14] sm:$0xf] %v223
    %256 = vst [vmem:[#allocation7 + $0x18] sm:$0xf] %v224
    %257 = vst [vmem:[#allocation7 + $0x1c] sm:$0xf] %v225
    %258 = vst [vmem:[#allocation7 + $0x20] sm:$0xf] %v226
    %259 = vst [vmem:[#allocation7 + $0x24] sm:$0xf] %v227
    %260 = vst [vmem:[#allocation7 + $0x28] sm:$0xf] %v228
    %261 = vst [vmem:[#allocation7 + $0x2c] sm:$0xf] %v229
    %262 = vst [vmem:[#allocation7 + $0x30] sm:$0xf] %v230
    %263 = vst [vmem:[#allocation7 + $0x34] sm:$0xf] %v231
    %264 = vst [vmem:[#allocation7 + $0x38] sm:$0xf] %v232
    %265 = vst [vmem:[#allocation7 + $0x3c] sm:$0xf] %v233
    // Predicated region
    $region18: #{tpu_custom_call.1} parent=1 // pred_check
      _
    $region19: #{tpu_custom_call.1} parent=1 // pred_check_branch
      %267 = sbr.rel (0) target = $region21
    $region20: #{tpu_custom_call.1} parent=1 // pred_region
      %s269 = ssub.s32 1024, 1024
      %270 = vsyncadd [#allocation4], %s269
      %s271 = sshll.u32 [#allocation7], 4
      %s272 = int_to_ptr.vmem [resolvable:$true] %s271
      %277 = dma.vmem_to_hbm [thread:$0]  %s272, 1024, %s2, [#allocation4], 64, 64, 4
    $region21: #{tpu_custom_call.1} parent=1 // pred_fallthru
      _
    // Predicated region
    $region22: #{tpu_custom_call.1} parent=1 // pred_check
      _
    $region23: #{tpu_custom_call.1} parent=1 // pred_check_branch
      %279 = sbr.rel (0) target = $region25
    $region24: #{tpu_custom_call.1} parent=1 // pred_region
      %280 = dma.done [#allocation4], 1024
    $region25: #{tpu_custom_call.1} parent=1 // pred_fallthru
      _
    %281 = vsyncpa [#allocation3], 1
    %282 = vsyncpa [#allocation6], 1
    %283 = vsyncpa [#allocation4], 1

</llo_original>
